<compile_context>
chip_gen: v7x
topology: tpu7x:2x2x1
jax: 0.10.0
libtpu: 0.0.40
codegen_flags: <defaults>
</compile_context>

<pallas_src>
import functools

import numpy as np

import jax
import jax.numpy as jnp
from jax.experimental import pallas as pl
from jax.experimental.pallas import tpu as pltpu


def _round_up(x, m):
    return ((x + m - 1) // m) * m


def _policy_kernel(x_ref, w1_ref, b1_ref, w2_ref, b2_ref, wh_ref, bh_ref,
                   diag_ref, out_ref):
    """Fused 2-layer ReLU MLP + combined (mean | dense-tril-cholesky) head.

    Batch lives on the lane dimension.
      x:    (S, TB)  bf16
      w1:   (H, S)   bf16    b1: (H, 1)     f32
      w2:   (H, H)   bf16    b2: (H, 1)     f32
      wh:   (ncols, H) bf16  bh: (ncols, 1) f32   (ncols = da + da*da; the
            packed-tril -> dense scatter is already folded in, upper-triangle
            rows are exactly zero)
      diag: (ncols, 1) f32   1.0 on dense-diagonal rows, 0.0 elsewhere
      out:  (ncols, TB) f32 = [mean rows | row-major lower-tri cholesky rows]
    """
    x = x_ref[...]                                                # bf16

    h1 = jnp.dot(w1_ref[...], x,
                 preferred_element_type=jnp.float32) + b1_ref[...]
    h1 = jnp.maximum(h1, 0.0)                                     # ReLU in f32

    h2 = jnp.dot(w2_ref[...], h1.astype(jnp.bfloat16),
                 preferred_element_type=jnp.float32) + b2_ref[...]
    h2 = jnp.maximum(h2, 0.0)                                     # ReLU in f32

    # single fused head matmul: [mean | dense lower-tri cholesky (pre-softplus)]
    head = jnp.dot(wh_ref[...], h2.astype(jnp.bfloat16),
                   preferred_element_type=jnp.float32) + bh_ref[...]

    # numerically stable softplus; applied only on diagonal rows via the
    # precomputed column mask (no iota / integer div / mod in-kernel).
    sp = jnp.maximum(head, 0.0) + jnp.log1p(jnp.exp(-jnp.abs(head)))
    out_ref[...] = jnp.where(diag_ref[...] > 0.5, sp, head)


def init_params(key, space_dim, action_dim, hidden):
    """PyTorch-Linear-style init, native (out_features, in_features) layout."""
    nc = action_dim * (action_dim + 1) // 2
    dims = [
        ("w1", (hidden, space_dim), space_dim), ("b1", (hidden,), space_dim),
        ("w2", (hidden, hidden), hidden),       ("b2", (hidden,), hidden),
        ("wm", (action_dim, hidden), hidden),   ("bm", (action_dim,), hidden),
        ("wc", (nc, hidden), hidden),           ("bc", (nc,), hidden),
    ]
    params = {}
    for name, shape, fan_in in dims:
        key, sub = jax.random.split(key)
        bound = 1.0 / np.sqrt(np.float32(fan_in))
        params[name] = jax.random.uniform(
            sub, shape, dtype=jnp.float32, minval=-bound, maxval=bound)
    return params


def prepare_params(params, action_dim):
    """One-time param packing for the kernel.

    * folds the packed-tril -> dense scatter (numpy one-hot) into the cholesky
      head weights/bias,
    * concatenates mean + cholesky heads into a single (ncols, H) matmul,
    * builds the (ncols, 1) diagonal-softplus mask,
    * casts weights to bf16 (f32 accumulation in kernel), biases stay f32.
    """
    da = action_dim
    nc = da * (da + 1) // 2
    ncols = da + da * da

    rows, cols = np.tril_indices(da)
    scatter = np.zeros((nc, da * da), np.float32)
    scatter[np.arange(nc), rows * da + cols] = 1.0
    scatter_t = jnp.asarray(scatter.T)                  # (da*da, nc)

    wh = jnp.concatenate([params["wm"], scatter_t @ params["wc"]], axis=0)
    bh = jnp.concatenate([params["bm"], scatter_t @ params["bc"]], axis=0)

    diag = np.zeros((ncols, 1), np.float32)
    diag[da + np.arange(da) * (da + 1), 0] = 1.0        # dense (j, j) rows

    return {
        "w1": params["w1"].astype(jnp.bfloat16),
        "b1": params["b1"].reshape(-1, 1).astype(jnp.float32),
        "w2": params["w2"].astype(jnp.bfloat16),
        "b2": params["b2"].reshape(-1, 1).astype(jnp.float32),
        "wh": wh.astype(jnp.bfloat16),
        "bh": bh.reshape(-1, 1).astype(jnp.float32),
        "diag": jnp.asarray(diag),
    }


@functools.partial(jax.jit, static_argnames=("action_dim",))
def policy_forward(state, prepared, action_dim):
    B, S = state.shape
    da = action_dim
    H = prepared["w1"].shape[0]
    ncols = da + da * da

    # Batch on lanes: tile is a multiple of 128, capped at 8192, and we split
    # into >=2 grid steps whenever the batch allows (v7x dual-TC sharding).
    LANE = 128
    B_pad0 = _round_up(B, LANE)
    if B_pad0 >= 2 * LANE:
        TB = min(8192, max(LANE, (B_pad0 // (2 * LANE)) * LANE))
    else:
        TB = B_pad0
    B_pad = _round_up(B_pad0, TB)

    x = state.astype(jnp.bfloat16).T                    # (S, B), batch on lanes
    if B_pad != B:
        x = jnp.pad(x, ((0, 0), (0, B_pad - B)))

    grid = (B_pad // TB,)

    def act_spec(rows):                                 # per-step activation tile
        return pl.BlockSpec((rows, TB), lambda i: (0, i))

    def fix_spec(r, c):                                 # VMEM-resident weights
        return pl.BlockSpec((r, c), lambda i: (0, 0))

    flops = 2 * B_pad * (S * H + H * H + H * ncols)
    bytes_accessed = (B_pad * S * 2
                      + (S * H + H * H + H * ncols) * 2
                      + (2 * H + 2 * ncols) * 4
                      + B_pad * ncols * 4)

    out = pl.pallas_call(
        _policy_kernel,
        grid=grid,
        out_shape=jax.ShapeDtypeStruct((ncols, B_pad), jnp.float32),
        in_specs=[
            act_spec(S),
            fix_spec(H, S), fix_spec(H, 1),
            fix_spec(H, H), fix_spec(H, 1),
            fix_spec(ncols, H), fix_spec(ncols, 1),
            fix_spec(ncols, 1),
        ],
        out_specs=act_spec(ncols),
        compiler_params=pltpu.CompilerParams(
            dimension_semantics=("parallel",)),
        cost_estimate=pl.CostEstimate(
            flops=flops,
            transcendentals=2 * B_pad * ncols,
            bytes_accessed=bytes_accessed),
    )(x, prepared["w1"], prepared["b1"], prepared["w2"], prepared["b2"],
      prepared["wh"], prepared["bh"], prepared["diag"])

    out = out[:, :B]                                    # (ncols, B)
    mean = out[:da, :].T                                # (B, da)
    cholesky = out[da:, :].T.reshape(B, da, da)         # (B, da, da)
    return mean, cholesky


def policy_reference(state, params, action_dim):
    """Pure-JAX f32 reference of the PyTorch forward (effective semantics)."""
    da = action_dim
    h1 = jax.nn.relu(state @ params["w1"].T + params["b1"])
    h2 = jax.nn.relu(h1 @ params["w2"].T + params["b2"])
    mean = h2 @ params["wm"].T + params["bm"]
    cv = h2 @ params["wc"].T + params["bc"]
    di = np.arange(1, da + 1)
    diag_idx = di * (di + 1) // 2 - 1
    cv = cv.at[:, diag_idx].set(jax.nn.softplus(cv[:, diag_idx]))
    rows, cols = np.tril_indices(da)
    chol = jnp.zeros((state.shape[0], da, da), jnp.float32)
    chol = chol.at[:, rows, cols].set(cv)
    return mean, chol


if __name__ == "__main__":
    # Small synthetic env: observation_space dim = 4, action_space dim = 3.
    batch = 2
    space_dim = 4
    action_dim = 3
    hidden = 32

    key = jax.random.PRNGKey(0)
    key, pkey, skey = jax.random.split(key, 3)
    params = init_params(pkey, space_dim, action_dim, hidden)
    prepared = prepare_params(params, action_dim)
    state = jax.random.normal(skey, (batch, space_dim), dtype=jnp.float32)

    mean, cholesky = policy_forward(state, prepared, action_dim=action_dim)
    jax.block_until_ready((mean, cholesky))

    assert mean.shape == (batch, action_dim)
    assert cholesky.shape == (batch, action_dim, action_dim)
    # strict upper triangle must be exactly zero
    iu = np.triu_indices(action_dim, k=1)
    assert bool(jnp.all(cholesky[:, iu[0], iu[1]] == 0.0))
    # diagonal must be strictly positive (softplus)
    assert bool(jnp.all(jnp.diagonal(cholesky, axis1=1, axis2=2) > 0.0))

    # numerical check against a pure-JAX f32 reference (bf16-tolerant)
    ref_mean, ref_chol = policy_reference(state, params, action_dim)
    np.testing.assert_allclose(np.asarray(mean), np.asarray(ref_mean),
                               atol=2e-2, rtol=2e-2)
    np.testing.assert_allclose(np.asarray(cholesky), np.asarray(ref_chol),
                               atol=2e-2, rtol=2e-2)
    print("KERNEL_OK")
</pallas_src>

<mosaic_0001>
module attributes {stable_mosaic.version = 11 : i64} {
  func.func @_policy_kernel(%arg0: i32, %arg1: memref<4x128xbf16, #tpu.memory_space<vmem>>, %arg2: memref<32x4xbf16, #tpu.memory_space<vmem>>, %arg3: memref<32x1xf32, #tpu.memory_space<vmem>>, %arg4: memref<32x32xbf16, #tpu.memory_space<vmem>>, %arg5: memref<32x1xf32, #tpu.memory_space<vmem>>, %arg6: memref<12x32xbf16, #tpu.memory_space<vmem>>, %arg7: memref<12x1xf32, #tpu.memory_space<vmem>>, %arg8: memref<12x1xf32, #tpu.memory_space<vmem>>, %arg9: memref<12x128xf32, #tpu.memory_space<vmem>>) attributes {dimension_semantics = [#tpu.dimension_semantics<parallel>], iteration_bounds = array<i64: 1>, scalar_prefetch = 0 : i64, scratch_operands = 0 : i64, tpu.core_type = #tpu.core_type<tc>, window_params = [{transform_indices = @transform_0, window_bounds = array<i64: 4, 128>}, {pipeline_mode = #tpu.pipeline_mode<synchronous>, transform_indices = @transform_1, window_bounds = array<i64: 32, 4>}, {pipeline_mode = #tpu.pipeline_mode<synchronous>, transform_indices = @transform_2, window_bounds = array<i64: 32, 1>}, {pipeline_mode = #tpu.pipeline_mode<synchronous>, transform_indices = @transform_3, window_bounds = array<i64: 32, 32>}, {pipeline_mode = #tpu.pipeline_mode<synchronous>, transform_indices = @transform_4, window_bounds = array<i64: 32, 1>}, {pipeline_mode = #tpu.pipeline_mode<synchronous>, transform_indices = @transform_5, window_bounds = array<i64: 12, 32>}, {pipeline_mode = #tpu.pipeline_mode<synchronous>, transform_indices = @transform_6, window_bounds = array<i64: 12, 1>}, {pipeline_mode = #tpu.pipeline_mode<synchronous>, transform_indices = @transform_7, window_bounds = array<i64: 12, 1>}, {transform_indices = @transform_8, window_bounds = array<i64: 12, 128>}]} {
    %c0 = arith.constant 0 : index
    %c0_0 = arith.constant 0 : index
    %0 = vector.load %arg1[%c0, %c0_0] : memref<4x128xbf16, #tpu.memory_space<vmem>>, vector<4x128xbf16>
    %c0_1 = arith.constant 0 : index
    %c0_2 = arith.constant 0 : index
    %1 = vector.load %arg2[%c0_1, %c0_2] : memref<32x4xbf16, #tpu.memory_space<vmem>>, vector<32x4xbf16>
    %cst = arith.constant dense<0.000000e+00> : vector<32x128xf32>
    %2 = tpu.matmul %1, %0, %cst {dimension_numbers = #tpu.dot_dimension_numbers<[1], [0], [0], [1], [0, 0, 1, 1], [], []>} : vector<32x4xbf16>, vector<4x128xbf16>, vector<32x128xf32> -> vector<32x128xf32>
    %c0_3 = arith.constant 0 : index
    %c0_4 = arith.constant 0 : index
    %3 = vector.load %arg3[%c0_3, %c0_4] : memref<32x1xf32, #tpu.memory_space<vmem>>, vector<32x1xf32>
    %4 = vector.broadcast %3 : vector<32x1xf32> to vector<32x128xf32>
    %5 = arith.addf %2, %4 : vector<32x128xf32>
    %cst_5 = arith.constant 0.000000e+00 : f32
    %6 = vector.broadcast %cst_5 : f32 to vector<32x128xf32>
    %7 = arith.maximumf %5, %6 : vector<32x128xf32>
    %c0_6 = arith.constant 0 : index
    %c0_7 = arith.constant 0 : index
    %8 = vector.load %arg4[%c0_6, %c0_7] : memref<32x32xbf16, #tpu.memory_space<vmem>>, vector<32x32xbf16>
    %9 = arith.truncf %7 : vector<32x128xf32> to vector<32x128xbf16>
    %cst_8 = arith.constant dense<0.000000e+00> : vector<32x128xf32>
    %10 = tpu.matmul %8, %9, %cst_8 {dimension_numbers = #tpu.dot_dimension_numbers<[1], [0], [0], [1], [0, 0, 1, 1], [], []>} : vector<32x32xbf16>, vector<32x128xbf16>, vector<32x128xf32> -> vector<32x128xf32>
    %c0_9 = arith.constant 0 : index
    %c0_10 = arith.constant 0 : index
    %11 = vector.load %arg5[%c0_9, %c0_10] : memref<32x1xf32, #tpu.memory_space<vmem>>, vector<32x1xf32>
    %12 = vector.broadcast %11 : vector<32x1xf32> to vector<32x128xf32>
    %13 = arith.addf %10, %12 : vector<32x128xf32>
    %cst_11 = arith.constant 0.000000e+00 : f32
    %14 = vector.broadcast %cst_11 : f32 to vector<32x128xf32>
    %15 = arith.maximumf %13, %14 : vector<32x128xf32>
    %c0_12 = arith.constant 0 : index
    %c0_13 = arith.constant 0 : index
    %16 = vector.load %arg6[%c0_12, %c0_13] : memref<12x32xbf16, #tpu.memory_space<vmem>>, vector<12x32xbf16>
    %17 = arith.truncf %15 : vector<32x128xf32> to vector<32x128xbf16>
    %cst_14 = arith.constant dense<0.000000e+00> : vector<12x128xf32>
    %18 = tpu.matmul %16, %17, %cst_14 {dimension_numbers = #tpu.dot_dimension_numbers<[1], [0], [0], [1], [0, 0, 1, 1], [], []>} : vector<12x32xbf16>, vector<32x128xbf16>, vector<12x128xf32> -> vector<12x128xf32>
    %c0_15 = arith.constant 0 : index
    %c0_16 = arith.constant 0 : index
    %19 = vector.load %arg7[%c0_15, %c0_16] : memref<12x1xf32, #tpu.memory_space<vmem>>, vector<12x1xf32>
    %20 = vector.broadcast %19 : vector<12x1xf32> to vector<12x128xf32>
    %21 = arith.addf %18, %20 : vector<12x128xf32>
    %cst_17 = arith.constant 0.000000e+00 : f32
    %22 = vector.broadcast %cst_17 : f32 to vector<12x128xf32>
    %23 = arith.maximumf %21, %22 : vector<12x128xf32>
    %24 = math.absf %21 : vector<12x128xf32>
    %cst_18 = arith.constant 0.000000e+00 : f32
    %25 = vector.broadcast %cst_18 : f32 to vector<12x128xf32>
    %26 = arith.subf %25, %24 : vector<12x128xf32>
    %27 = math.exp %26 : vector<12x128xf32>
    %28 = math.log1p %27 : vector<12x128xf32>
    %29 = arith.addf %23, %28 : vector<12x128xf32>
    %c0_19 = arith.constant 0 : index
    %c0_20 = arith.constant 0 : index
    %30 = vector.load %arg8[%c0_19, %c0_20] : memref<12x1xf32, #tpu.memory_space<vmem>>, vector<12x1xf32>
    %cst_21 = arith.constant 5.000000e-01 : f32
    %31 = vector.broadcast %cst_21 : f32 to vector<12x1xf32>
    %32 = arith.cmpf ogt, %30, %31 : vector<12x1xf32>
    %33 = vector.shape_cast %32 : vector<12x1xi1> to vector<12x1xi1>
    %34 = vector.broadcast %33 : vector<12x1xi1> to vector<12x128xi1>
    %35 = arith.select %34, %29, %21 : vector<12x128xi1>, vector<12x128xf32>
    %c0_22 = arith.constant 0 : index
    %c0_23 = arith.constant 0 : index
    %36 = vector.load %arg9[%c0_22, %c0_23] : memref<12x128xf32, #tpu.memory_space<vmem>>, vector<12x128xf32>
    tpu.vector_store %arg9[%c0_22, %c0_23], %35 {strides = array<i32>} : memref<12x128xf32, #tpu.memory_space<vmem>>, vector<12x128xf32>,
    return
  }
  func.func @transform_0(%arg0: i32) -> (i32, i32) {
    %c0_i32 = arith.constant 0 : i32
    %c0_i32_0 = arith.constant 0 : i32
    return %c0_i32, %arg0 : i32, i32
  }
  func.func @transform_1(%arg0: i32) -> (i32, i32) {
    %c0_i32 = arith.constant 0 : i32
    %c0_i32_0 = arith.constant 0 : i32
    %c0_i32_1 = arith.constant 0 : i32
    return %c0_i32, %c0_i32_0 : i32, i32
  }
  func.func @transform_2(%arg0: i32) -> (i32, i32) {
    %c0_i32 = arith.constant 0 : i32
    %c0_i32_0 = arith.constant 0 : i32
    %c0_i32_1 = arith.constant 0 : i32
    return %c0_i32, %c0_i32_0 : i32, i32
  }
  func.func @transform_3(%arg0: i32) -> (i32, i32) {
    %c0_i32 = arith.constant 0 : i32
    %c0_i32_0 = arith.constant 0 : i32
    %c0_i32_1 = arith.constant 0 : i32
    return %c0_i32, %c0_i32_0 : i32, i32
  }
  func.func @transform_4(%arg0: i32) -> (i32, i32) {
    %c0_i32 = arith.constant 0 : i32
    %c0_i32_0 = arith.constant 0 : i32
    %c0_i32_1 = arith.constant 0 : i32
    return %c0_i32, %c0_i32_0 : i32, i32
  }
  func.func @transform_5(%arg0: i32) -> (i32, i32) {
    %c0_i32 = arith.constant 0 : i32
    %c0_i32_0 = arith.constant 0 : i32
    %c0_i32_1 = arith.constant 0 : i32
    return %c0_i32, %c0_i32_0 : i32, i32
  }
  func.func @transform_6(%arg0: i32) -> (i32, i32) {
    %c0_i32 = arith.constant 0 : i32
    %c0_i32_0 = arith.constant 0 : i32
    %c0_i32_1 = arith.constant 0 : i32
    return %c0_i32, %c0_i32_0 : i32, i32
  }
  func.func @transform_7(%arg0: i32) -> (i32, i32) {
    %c0_i32 = arith.constant 0 : i32
    %c0_i32_0 = arith.constant 0 : i32
    %c0_i32_1 = arith.constant 0 : i32
    return %c0_i32, %c0_i32_0 : i32, i32
  }
  func.func @transform_8(%arg0: i32) -> (i32, i32) {
    %c0_i32 = arith.constant 0 : i32
    %c0_i32_0 = arith.constant 0 : i32
    return %c0_i32, %arg0 : i32, i32
  }
}

</mosaic_0001>

<llo_original>
// kernel: policy_forward.1
$region0: #{policy_forward.1}
  #allocation0 [shape = 'u32[]', space=smem, size = 0x4, offset = 0x4, fixed_abs, tag = 'smem constant byte address 0x4 - core index']
  #allocation1 [shape = 'u32[144,128]{1,0:T(1,128)}', space=vmem, size = 0x12000, scoped, tag = 'internal scratch']
  %s0 = inlined_call_operand.vmem [shape: bf16[4,128], index: 0, kind: input, shape index: {}]
  %s1 = inlined_call_operand.vmem [shape: bf16[32,4], index: 1, kind: input, shape index: {}]
  %s2 = inlined_call_operand.vmem [shape: f32[32,1], index: 2, kind: input, shape index: {}]
  %s3 = inlined_call_operand.vmem [shape: bf16[32,32], index: 3, kind: input, shape index: {}]
  %s4 = inlined_call_operand.vmem [shape: f32[32,1], index: 4, kind: input, shape index: {}]
  %s5 = inlined_call_operand.vmem [shape: bf16[12,32], index: 5, kind: input, shape index: {}]
  %s6 = inlined_call_operand.vmem [shape: f32[12,1], index: 6, kind: input, shape index: {}]
  %s7 = inlined_call_operand.vmem [shape: f32[12,1], index: 7, kind: input, shape index: {}]
  %s8 = inlined_call_operand.vmem [shape: f32[12,128], index: 8, kind: output, shape index: {}]
  %s9 = sld [smem:[#allocation0]]
  $region42: #{policy_forward.1} parent=0
    _
  %s11 = ssub.s32 1, %s9
  %s12 = scalar_select 0, %s11, %s9
  // Predicated region
  $region2: #{policy_forward.1} parent=0 // pred_check
    _
  $region3: #{policy_forward.1} parent=0 // pred_check_branch
    %14 = sbr.rel (0) target = $region5
  $region4: #{policy_forward.1} parent=0 // pred_region
    _
  $region5: #{policy_forward.1} parent=0 // pred_fallthru
    _
  // Predicated region
  $region6: #{policy_forward.1} parent=0 // pred_check
    _
  $region7: #{policy_forward.1} parent=0 // pred_check_branch
    %16 = sbr.rel (0) target = $region9
  $region8: #{policy_forward.1} parent=0 // pred_region
    _
  $region9: #{policy_forward.1} parent=0 // pred_fallthru
    _
  // Predicated region
  $region10: #{policy_forward.1} parent=0 // pred_check
    _
  $region11: #{policy_forward.1} parent=0 // pred_check_branch
    %18 = sbr.rel (0) target = $region13
  $region12: #{policy_forward.1} parent=0 // pred_region
    _
  $region13: #{policy_forward.1} parent=0 // pred_fallthru
    _
  // Predicated region
  $region14: #{policy_forward.1} parent=0 // pred_check
    _
  $region15: #{policy_forward.1} parent=0 // pred_check_branch
    %20 = sbr.rel (0) target = $region17
  $region16: #{policy_forward.1} parent=0 // pred_region
    _
  $region17: #{policy_forward.1} parent=0 // pred_fallthru
    _
  // Predicated region
  $region18: #{policy_forward.1} parent=0 // pred_check
    _
  $region19: #{policy_forward.1} parent=0 // pred_check_branch
    %22 = sbr.rel (0) target = $region21
  $region20: #{policy_forward.1} parent=0 // pred_region
    _
  $region21: #{policy_forward.1} parent=0 // pred_fallthru
    _
  // Predicated region
  $region22: #{policy_forward.1} parent=0 // pred_check
    _
  $region23: #{policy_forward.1} parent=0 // pred_check_branch
    %24 = sbr.rel (0) target = $region25
  $region24: #{policy_forward.1} parent=0 // pred_region
    _
  $region25: #{policy_forward.1} parent=0 // pred_fallthru
    _
  // Predicated region
  $region26: #{policy_forward.1} parent=0 // pred_check
    _
  $region27: #{policy_forward.1} parent=0 // pred_check_branch
    %26 = sbr.rel (0) target = $region29
  $region28: #{policy_forward.1} parent=0 // pred_region
    _
  $region29: #{policy_forward.1} parent=0 // pred_fallthru
    _
  // Predicated region
  $region30: #{policy_forward.1} parent=0 // pred_check
    _
  $region31: #{policy_forward.1} parent=0 // pred_check_branch
    %28 = sbr.rel (0) target = $region33
  $region32: #{policy_forward.1} parent=0 // pred_region
    _
  $region33: #{policy_forward.1} parent=0 // pred_fallthru
    _
  %v30 = vld [vmem:[%s0] sm:$0x3]
  %v31 = vld [vmem:[%s1] sm:$0xf]
  %v32 = vld [vmem:[%s1 + $0x4] sm:$0xf]
  %v33 = vld [vmem:[%s1 + $0x8] sm:$0xf]
  %v34 = vld [vmem:[%s1 + $0xc] sm:$0xf]
  %v35 = vld [vmem:[%s2] sm:$0xff]
  %v36 = vld [vmem:[%s2 + $0x8] sm:$0xff]
  %v37 = vld [vmem:[%s2 + $0x10] sm:$0xff]
  %v38 = vld [vmem:[%s2 + $0x18] sm:$0xff]
  %40 = vset.pattern.permute.xlu0 0
  %41 = vperm.xlu0 %40, %v35
  %v42 = vpop.permute.xlu0 %41
  %45 = vset.pattern.permute.xlu0 0
  %46 = vperm.xlu0 %45, %v36
  %v47 = vpop.permute.xlu0 %46
  %50 = vset.pattern.permute.xlu0 0
  %51 = vperm.xlu0 %50, %v37
  %v52 = vpop.permute.xlu0 %51
  %55 = vset.pattern.permute.xlu0 0
  %56 = vperm.xlu0 %55, %v38
  %v57 = vpop.permute.xlu0 %56
  %v63 = vunpack.c.l.b16 %v31
  %v64 = vunpack.c.l.b16 %v32
  %v65 = vunpack.c.l.b16 %v33
  %v66 = vunpack.c.l.b16 %v34
  %v67 = vpack.c.b16 %v64, %v63
  %v68 = vpack.c.b16 %v66, %v65
  %vm69 = vcmask 31744
  %v71 = vsel %vm69, %v67, 0
  %v74 = vsel %vm69, %v68, 0
  %vm76 = vcmask 1041408
  %v78 = vsel %vm76, %v30, 0
  %80 = vmatprep.subr.bf16.mxu0 0
  %81 = vmatpush1.bf16.msra.mxu0 %v78
  %82 = vmatprep.subr.bf16.mxu0 0
  %83 = vmatpush1.bf16.msra.mxu0 0
  %84 = vmatprep.subr.bf16.mxu0 0
  %85 = vmatpush1.bf16.msra.mxu0 0
  %86 = vmatprep.subr.bf16.mxu0 0
  %87 = vmatpush1.bf16.msra.mxu0 0
  %88 = vmatprep.subr.bf16.mxu0 0
  %89 = vmatpush1.bf16.msra.mxu0 0
  %90 = vmatprep.subr.bf16.mxu0 0
  %91 = vmatpush1.bf16.msra.mxu0 0
  %92 = vmatprep.subr.bf16.mxu0 0
  %93 = vmatpush1.bf16.msra.mxu0 0
  %94 = vmatprep.subr.bf16.mxu0 0
  %95 = vmatpush1.bf16.msra.mxu0 0
  %96 = vmatprep.subr.bf16.mxu0 0
  %97 = vmatpush1.bf16.msra.mxu0 0
  %98 = vmatprep.subr.bf16.mxu0 0
  %99 = vmatpush1.bf16.msra.mxu0 0
  %100 = vmatprep.subr.bf16.mxu0 0
  %101 = vmatpush1.bf16.msra.mxu0 0
  %102 = vmatprep.subr.bf16.mxu0 0
  %103 = vmatpush1.bf16.msra.mxu0 0
  %104 = vmatprep.subr.bf16.mxu0 0
  %105 = vmatpush1.bf16.msra.mxu0 0
  %106 = vmatprep.subr.bf16.mxu0 0
  %107 = vmatpush1.bf16.msra.mxu0 0
  %108 = vmatprep.subr.bf16.mxu0 0
  %109 = vmatpush1.bf16.msra.mxu0 0
  %110 = vmatprep.subr.bf16.mxu0 0
  %111 = vmatpush1.bf16.msra.mxu0 0
  %112 = vmatprep.mubr.bf16.mxu0 0
  %113 = vmatmul.mubr.bf16.gmra.mrb[0].mxu0 %v71
  %v114 = vpop.f32.mrb[0].mxu0
  %v115 = vadd.f32 %v42, %v114
  %v116 = vpop.f32.mrb[0].mxu0
  %v117 = vpop.f32.mrb[0].mxu0
  %v118 = vadd.f32 %v47, %v117
  %v119 = vpop.f32.mrb[0].mxu0
  %120 = vmatprep.mubr.bf16.mxu0 0
  %121 = vmatmul.mubr.bf16.gmra.mrb[0].mxu0 %v74
  %v122 = vpop.f32.mrb[0].mxu0
  %v123 = vadd.f32 %v52, %v122
  %v124 = vpop.f32.mrb[0].mxu0
  %v125 = vpop.f32.mrb[0].mxu0
  %v126 = vadd.f32 %v57, %v125
  %v127 = vpop.f32.mrb[0].mxu0
  %128 = vdwg.mxu0
  %v129 = vmax.f32 %v115, 0.0
  %v130 = vmax.f32 %v118, 0.0
  %v131 = vmax.f32 %v123, 0.0
  %v132 = vmax.f32 %v126, 0.0
  %v133 = vld [vmem:[%s3] sm:$0xf]
  %v134 = vld [vmem:[%s3 + $0x4] sm:$0xf]
  %v135 = vld [vmem:[%s3 + $0x8] sm:$0xf]
  %v136 = vld [vmem:[%s3 + $0xc] sm:$0xf]
  %v137 = vpack.c.bf16 %v130, %v129
  %v138 = vpack.c.bf16 %v132, %v131
  %v139 = vld [vmem:[%s4] sm:$0xff]
  %v140 = vld [vmem:[%s4 + $0x8] sm:$0xff]
  %v141 = vld [vmem:[%s4 + $0x10] sm:$0xff]
  %v142 = vld [vmem:[%s4 + $0x18] sm:$0xff]
  %144 = vset.pattern.permute.xlu0 0
  %145 = vperm.xlu0 %144, %v139
  %v146 = vpop.permute.xlu0 %145
  %149 = vset.pattern.permute.xlu0 0
  %150 = vperm.xlu0 %149, %v140
  %v151 = vpop.permute.xlu0 %150
  %154 = vset.pattern.permute.xlu0 0
  %155 = vperm.xlu0 %154, %v141
  %v156 = vpop.permute.xlu0 %155
  %159 = vset.pattern.permute.xlu0 0
  %160 = vperm.xlu0 %159, %v142
  %v161 = vpop.permute.xlu0 %160
  %v167 = vunpack.c.l.b16 %v133
  %v168 = vunpack.c.l.b16 %v134
  %v169 = vunpack.c.l.b16 %v135
  %v170 = vunpack.c.l.b16 %v136
  %v171 = vpack.c.b16 %v168, %v167
  %v172 = vpack.c.b16 %v170, %v169
  %vm173 = vcmask 261120
  %v175 = vsel %vm173, %v171, 0
  %v178 = vsel %vm173, %v172, 0
  %180 = vmatprep.subr.bf16.mxu0 0
  %181 = vmatpush1.bf16.msra.mxu0 %v137
  %182 = vmatprep.subr.bf16.mxu0 0
  %183 = vmatpush1.bf16.msra.mxu0 %v138
  %184 = vmatprep.subr.bf16.mxu0 0
  %185 = vmatpush1.bf16.msra.mxu0 0
  %186 = vmatprep.subr.bf16.mxu0 0
  %187 = vmatpush1.bf16.msra.mxu0 0
  %188 = vmatprep.subr.bf16.mxu0 0
  %189 = vmatpush1.bf16.msra.mxu0 0
  %190 = vmatprep.subr.bf16.mxu0 0
  %191 = vmatpush1.bf16.msra.mxu0 0
  %192 = vmatprep.subr.bf16.mxu0 0
  %193 = vmatpush1.bf16.msra.mxu0 0
  %194 = vmatprep.subr.bf16.mxu0 0
  %195 = vmatpush1.bf16.msra.mxu0 0
  %196 = vmatprep.subr.bf16.mxu0 0
  %197 = vmatpush1.bf16.msra.mxu0 0
  %198 = vmatprep.subr.bf16.mxu0 0
  %199 = vmatpush1.bf16.msra.mxu0 0
  %200 = vmatprep.subr.bf16.mxu0 0
  %201 = vmatpush1.bf16.msra.mxu0 0
  %202 = vmatprep.subr.bf16.mxu0 0
  %203 = vmatpush1.bf16.msra.mxu0 0
  %204 = vmatprep.subr.bf16.mxu0 0
  %205 = vmatpush1.bf16.msra.mxu0 0
  %206 = vmatprep.subr.bf16.mxu0 0
  %207 = vmatpush1.bf16.msra.mxu0 0
  %208 = vmatprep.subr.bf16.mxu0 0
  %209 = vmatpush1.bf16.msra.mxu0 0
  %210 = vmatprep.subr.bf16.mxu0 0
  %211 = vmatpush1.bf16.msra.mxu0 0
  %212 = vmatprep.mubr.bf16.mxu0 0
  %213 = vmatmul.mubr.bf16.gmra.mrb[0].mxu0 %v175
  %v214 = vpop.f32.mrb[0].mxu0
  %v215 = vadd.f32 %v146, %v214
  %v216 = vpop.f32.mrb[0].mxu0
  %v217 = vpop.f32.mrb[0].mxu0
  %v218 = vadd.f32 %v151, %v217
  %v219 = vpop.f32.mrb[0].mxu0
  %220 = vmatprep.mubr.bf16.mxu0 0
  %221 = vmatmul.mubr.bf16.gmra.mrb[0].mxu0 %v178
  %v222 = vpop.f32.mrb[0].mxu0
  %v223 = vadd.f32 %v156, %v222
  %v224 = vpop.f32.mrb[0].mxu0
  %v225 = vpop.f32.mrb[0].mxu0
  %v226 = vadd.f32 %v161, %v225
  %v227 = vpop.f32.mrb[0].mxu0
  %228 = vdwg.mxu0
  %v229 = vmax.f32 %v215, 0.0
  %v230 = vmax.f32 %v218, 0.0
  %v231 = vmax.f32 %v223, 0.0
  %v232 = vmax.f32 %v226, 0.0
  %v233 = vld [vmem:[%s5] sm:$0xf]
  %v234 = vld [vmem:[%s5 + $0x4] sm:$0x3]
  %v235 = vpack.c.bf16 %v230, %v229
  %v236 = vpack.c.bf16 %v232, %v231
  %v237 = vld [vmem:[%s6] sm:$0xff]
  %v238 = vld [vmem:[%s6 + $0x8] sm:$0xf]
  %240 = vset.pattern.permute.xlu0 0
  %241 = vperm.xlu0 %240, %v237
  %v242 = vpop.permute.xlu0 %241
  %245 = vset.pattern.permute.xlu0 0
  %246 = vperm.xlu0 %245, %v238
  %v247 = vpop.permute.xlu0 %246
  %v251 = vunpack.c.l.b16 %v233
  %v252 = vunpack.c.l.b16 %v234
  %v253 = vpack.c.b16 %v252, %v251
  %v255 = vsel %vm173, %v253, 0
  %257 = vmatprep.subr.bf16.mxu0 0
  %258 = vmatpush1.bf16.msra.mxu0 %v235
  %259 = vmatprep.subr.bf16.mxu0 0
  %260 = vmatpush1.bf16.msra.mxu0 %v236
  %261 = vmatprep.subr.bf16.mxu0 0
  %262 = vmatpush1.bf16.msra.mxu0 0
  %263 = vmatprep.subr.bf16.mxu0 0
  %264 = vmatpush1.bf16.msra.mxu0 0
  %265 = vmatprep.subr.bf16.mxu0 0
  %266 = vmatpush1.bf16.msra.mxu0 0
  %267 = vmatprep.subr.bf16.mxu0 0
  %268 = vmatpush1.bf16.msra.mxu0 0
  %269 = vmatprep.subr.bf16.mxu0 0
  %270 = vmatpush1.bf16.msra.mxu0 0
  %271 = vmatprep.subr.bf16.mxu0 0
  %272 = vmatpush1.bf16.msra.mxu0 0
  %273 = vmatprep.subr.bf16.mxu0 0
  %274 = vmatpush1.bf16.msra.mxu0 0
  %275 = vmatprep.subr.bf16.mxu0 0
  %276 = vmatpush1.bf16.msra.mxu0 0
  %277 = vmatprep.subr.bf16.mxu0 0
  %278 = vmatpush1.bf16.msra.mxu0 0
  %279 = vmatprep.subr.bf16.mxu0 0
  %280 = vmatpush1.bf16.msra.mxu0 0
  %281 = vmatprep.subr.bf16.mxu0 0
  %282 = vmatpush1.bf16.msra.mxu0 0
  %283 = vmatprep.subr.bf16.mxu0 0
  %284 = vmatpush1.bf16.msra.mxu0 0
  %285 = vmatprep.subr.bf16.mxu0 0
  %286 = vmatpush1.bf16.msra.mxu0 0
  %287 = vmatprep.subr.bf16.mxu0 0
  %288 = vmatpush1.bf16.msra.mxu0 0
  %289 = vmatprep.mubr.bf16.mxu0 0
  %290 = vmatmul.mubr.bf16.gmra.mrb[0].mxu0 %v255
  %v291 = vpop.f32.mrb[0].mxu0
  %v292 = vadd.f32 %v242, %v291
  %v293 = vpop.f32.mrb[0].mxu0
  %v294 = vpop.f32.mrb[0].mxu0
  %v295 = vadd.f32 %v247, %v294
  %v296 = vpop.f32.mrb[0].mxu0
  %297 = vdwg.mxu0
  %v298 = vmax.f32 %v292, 0.0
  %v299 = vmax.f32 %v295, 0.0
  %v300 = vand.u32 2147483647, %v292
  %v301 = vand.u32 2147483647, %v295
  %v302 = vsub.f32 0.0, %v300
  %v303 = vsub.f32 0.0, %v301
  %v304 = vmul.f32 %v302, 1.442695
  %v305 = vpow.pop %v304
  %v306 = vmul.f32 %v303, 1.442695
  %v307 = vpow.pop %v306
  %v308 = vadd.f32 %v305, 1.0
  %v309 = vlog2.pop %v308
  %v310 = vmul.f32 %v309, 0.6931472
  %v311 = vmul.f32 -0.5, %v305
  %v312 = vadd.f32 %v311, 1.0
  %v313 = vmul.f32 %v312, %v305
  %v314 = vand.u32 2147483647, %v305
  %vm315 = vcmp.lt.f32.partialorder %v314, 0.0004427343
  %v316 = vsel %vm315, %v313, %v310
  %v317 = vadd.f32 %v307, 1.0
  %v318 = vlog2.pop %v317
  %v319 = vmul.f32 %v318, 0.6931472
  %v320 = vmul.f32 -0.5, %v307
  %v321 = vadd.f32 %v320, 1.0
  %v322 = vmul.f32 %v321, %v307
  %v323 = vand.u32 2147483647, %v307
  %vm324 = vcmp.lt.f32.partialorder %v323, 0.0004427343
  %v325 = vsel %vm324, %v322, %v319
  %v326 = vadd.f32 %v298, %v316
  %v327 = vadd.f32 %v299, %v325
  %v328 = vld [vmem:[%s7] sm:$0xff]
  %v329 = vld [vmem:[%s7 + $0x8] sm:$0xf]
  %vm330 = vcmp.gt.f32.partialorder %v328, 0.5
  %vm331 = vcmp.gt.f32.partialorder %v329, 0.5
  %v332 = vsel %vm330, 1, 0
  %v333 = vsel %vm331, 1, 0
  %334 = vset.pattern.permute.xlu0 0
  %335 = vperm.xlu0 %334, %v332
  %v336 = vpop.permute.xlu0 %335
  %337 = vset.pattern.permute.xlu0 0
  %338 = vperm.xlu0 %337, %v333
  %v339 = vpop.permute.xlu0 %338
  %vm340 = vcmp.eq.s32.totalorder %v336, 1
  %vm341 = vcmp.eq.s32.totalorder %v339, 1
  %v342 = vsel %vm340, %v326, %v292
  %v343 = vsel %vm341, %v327, %v295
  %344 = vst [vmem:[%s8] sm:$0xff] %v342
  %345 = vst [vmem:[%s8 + $0x8] sm:$0xf] %v343
  // Predicated region
  $region34: #{policy_forward.1} parent=0 // pred_check
    _
  $region35: #{policy_forward.1} parent=0 // pred_check_branch
    %347 = sbr.rel (0) target = $region37
  $region36: #{policy_forward.1} parent=0 // pred_region
    _
  $region37: #{policy_forward.1} parent=0 // pred_fallthru
    _
  // Predicated region
  $region38: #{policy_forward.1} parent=0 // pred_check
    _
  $region39: #{policy_forward.1} parent=0 // pred_check_branch
    %349 = sbr.rel (0) target = $region41
  $region40: #{policy_forward.1} parent=0 // pred_region
    _
  $region41: #{policy_forward.1} parent=0 // pred_fallthru
    _

</llo_original>
